<compile_context>
chip_gen: v7x
topology: tpu7x:2x2x1
jax: 0.10.0
libtpu: 0.0.40
codegen_flags: <defaults>
</compile_context>

<pallas_src>
import functools
import math

import jax
import jax.numpy as jnp
from jax.experimental import pallas as pl
from jax.experimental.pallas import tpu as pltpu


def _round_up(x, m):
    return ((x + m - 1) // m) * m


# ----------------------------------------------------------------------------
# Kernel
# ----------------------------------------------------------------------------
def _multicat_kernel(x_ref, w_ref, b_ref, mask_ref, seg_ref, segt_ref,
                     logits_out_ref, probs_out_ref, *, nb):
    """One batch tile: fused branch linears + masking + segmented softmax."""
    x = x_ref[...]                       # (TB, H)         f32
    w = w_ref[...]                       # (H, A_pad)      f32 fused, zero-padded cols
    b = b_ref[...]                       # (1, A_pad)      f32
    allow = mask_ref[...] != 0           # (TB, A_pad)     int8 -> bool; pad lanes are 0
    seg_f = seg_ref[...]                 # (NB_pad, A_pad) f32 one-hot (zero pad rows)
    seg_b = seg_f > 0.5                  # branch membership, bool

    # One MXU matmul for all branches (fused weights), f32 accumulation.
    logits = jnp.dot(x, w, preferred_element_type=jnp.float32) + b

    # _mask_branch: identical to logits*allow - 1e8*(1-allow) for a {0,1} mask,
    # but a single VPU select instead of 3 full-width VALU ops.
    norm_logits = jnp.where(allow, logits, jnp.float32(-1.0e8))
    logits_out_ref[...] = norm_logits.astype(logits_out_ref.dtype)

    # Per-branch max only (NB is tiny & static), broadcast back to lanes.
    # NOTE: do NOT collapse to a per-row global max -- a branch far below the
    # row max would underflow its whole softmax to 0/0.
    neg_inf = jnp.float32(-jnp.inf)
    zero = jnp.float32(0.0)
    max_bcast = jnp.zeros_like(norm_logits)
    for k in range(nb):                                  # static python loop
        seg_k = seg_b[k:k + 1, :]                        # (1, A_pad) bool
        mk = jnp.max(jnp.where(seg_k, norm_logits, neg_inf),
                     axis=-1, keepdims=True)             # (TB, 1) per-branch max
        max_bcast = max_bcast + jnp.where(seg_k, mk, zero)

    # ONE full-width exp; padding lanes give exp(-1e8 - 0) == 0.
    e = jnp.exp(norm_logits - max_bcast)

    # Per-branch denominators + broadcast-back on the MXU (near-free slots).
    denom = jnp.dot(e, segt_ref[...],
                    preferred_element_type=jnp.float32)          # (TB, NB_pad)
    # Real branches have denom >= 1 (their max lane contributes exp(0)=1);
    # padded fake-branch columns have denom == 0 -> clamp avoids inf (their
    # reciprocal is multiplied by 0 below anyway).
    inv = 1.0 / jnp.maximum(denom, jnp.float32(1e-30))           # exact reciprocal
    inv_bcast = jnp.dot(inv, seg_f,
                        preferred_element_type=jnp.float32)      # (TB, A_pad)
    probs_out_ref[...] = (e * inv_bcast).astype(probs_out_ref.dtype)


# ----------------------------------------------------------------------------
# Wrapper
# ----------------------------------------------------------------------------
def _pick_batch_tile(B):
    # >= 2 grid steps when possible so the "parallel" batch axis can shard
    # across v7x's two TensorCores; rows stay a multiple of 8 (f32 sublane)
    # and <= 1024 to amortize the ~0.35us/step overhead without stressing
    # VMEM on any generation.
    if B <= 8:
        return B
    return min(1024, _round_up(pl.cdiv(B, 2), 8))


def multi_categorical_forward(inputs, masks, params, act_sizes):
    """Returns a list of (norm_logits, probs) per branch (== the tensors held
    by each CategoricalDistInstance the torch module would build)."""
    B, H = inputs.shape
    act_sizes = tuple(int(s) for s in act_sizes)
    A_total = int(sum(act_sizes))
    NB = len(act_sizes)
    A_pad = max(128, _round_up(A_total, 128))            # lane-dense outputs
    NB_pad = params["seg_onehot"].shape[0]

    w_cat = params["w_cat"]          # (H, A_pad)      fused, zero-padded columns
    b_cat = params["b_cat"]          # (1, A_pad)
    seg = params["seg_onehot"]       # (NB_pad, A_pad)
    seg_t = params["seg_onehot_t"]   # (A_pad, NB_pad)

    # int8 action mask (4x fewer HBM bytes than f32); padding lanes are 0 so
    # they are masked to -1e8 and belong to no branch softmax.
    # TODO(synk): produce/store the mask padded + int8 upstream so this pad op
    # disappears from the hot path entirely.
    allow_i8 = masks.astype(jnp.int8)
    if A_pad > A_total:
        allow_i8 = jnp.pad(allow_i8, ((0, 0), (0, A_pad - A_total)))

    TB = _pick_batch_tile(B)
    grid = (pl.cdiv(B, TB),)

    out_shape = (
        jax.ShapeDtypeStruct((B, A_pad), jnp.float32),   # masked logits slab
        jax.ShapeDtypeStruct((B, A_pad), jnp.float32),   # probs slab
    )

    logits_pad, probs_pad = pl.pallas_call(
        functools.partial(_multicat_kernel, nb=NB),
        out_shape=out_shape,
        grid=grid,
        in_specs=[
            pl.BlockSpec((TB, H), lambda i: (i, 0)),          # activations (tiled)
            pl.BlockSpec((H, A_pad), lambda i: (0, 0)),       # fused weights (resident)
            pl.BlockSpec((1, A_pad), lambda i: (0, 0)),       # fused bias (resident)
            pl.BlockSpec((TB, A_pad), lambda i: (i, 0)),      # int8 action mask (tiled)
            pl.BlockSpec((NB_pad, A_pad), lambda i: (0, 0)),  # branch one-hot (resident)
            pl.BlockSpec((A_pad, NB_pad), lambda i: (0, 0)),  # one-hot transpose (resident)
        ],
        out_specs=(
            pl.BlockSpec((TB, A_pad), lambda i: (i, 0)),
            pl.BlockSpec((TB, A_pad), lambda i: (i, 0)),
        ),
        compiler_params=pltpu.CompilerParams(
            dimension_semantics=("parallel",),                # shard batch over TCs
        ),
    )(inputs, w_cat, b_cat, allow_i8, seg, seg_t)

    # Per-branch views, mirroring the torch forward's list of distributions.
    # TODO(synk): downstream log_prob/entropy/sample should consume the
    # lane-dense slabs + seg table directly (or be fused here) to avoid these
    # lane-sparse re-slices.
    branches = []
    start = 0
    for size in act_sizes:
        branches.append((logits_pad[:, start:start + size],
                         probs_pad[:, start:start + size]))
        start += size
    return branches


# ----------------------------------------------------------------------------
# Deterministic parameter init (mirrors mlagents linear_layer:
#   KaimingHeNormal kernel init scaled by kernel_gain=0.1, zero bias),
# fused + padded for the kernel.
# ----------------------------------------------------------------------------
def init_params(key, hidden_size, act_sizes):
    act_sizes = tuple(int(s) for s in act_sizes)
    A_total = int(sum(act_sizes))
    NB = len(act_sizes)
    A_pad = max(128, _round_up(A_total, 128))
    NB_pad = max(8, _round_up(NB, 8))                    # sublane-friendly seg rows

    kaiming_std = math.sqrt(2.0 / hidden_size)           # fan_in mode
    kernel_gain = 0.1

    keys = jax.random.split(key, NB)
    w_cat = jnp.zeros((hidden_size, A_pad), jnp.float32)
    seg = jnp.zeros((NB_pad, A_pad), jnp.float32)
    start = 0
    for idx, size in enumerate(act_sizes):
        # Stored transposed relative to torch.nn.Linear.weight: (hidden, size).
        w_b = (jax.random.normal(keys[idx], (hidden_size, size), jnp.float32)
               * kaiming_std * kernel_gain)
        w_cat = w_cat.at[:, start:start + size].set(w_b)
        seg = seg.at[idx, start:start + size].set(1.0)
        start += size
    b_cat = jnp.zeros((1, A_pad), jnp.float32)
    return {"w_cat": w_cat, "b_cat": b_cat,
            "seg_onehot": seg, "seg_onehot_t": seg.T}


# ----------------------------------------------------------------------------
# Pure-JAX reference for verification
# ----------------------------------------------------------------------------
def reference_forward(inputs, masks, params, act_sizes):
    out = []
    start = 0
    for size in act_sizes:
        w = params["w_cat"][:, start:start + size]
        b = params["b_cat"][:, start:start + size]
        allow = masks[:, start:start + size].astype(jnp.float32)
        logits = inputs @ w + b
        norm_logits = logits * allow - 1.0e8 * (1.0 - allow)
        probs = jax.nn.softmax(norm_logits, axis=-1)
        out.append((norm_logits, probs))
        start += size
    return out


if __name__ == "__main__":
    BATCH, HIDDEN = 2, 32
    ACT_SIZES = (3, 2, 5)
    A_TOTAL = sum(ACT_SIZES)

    key = jax.random.PRNGKey(0)
    k_x, k_p = jax.random.split(key)
    x = jax.random.normal(k_x, (BATCH, HIDDEN), jnp.float32)

    # Deterministic action mask with a couple of blocked actions.
    masks = jnp.ones((BATCH, A_TOTAL), jnp.float32)
    masks = masks.at[0, 1].set(0.0).at[1, 6].set(0.0)

    params = init_params(k_p, HIDDEN, ACT_SIZES)

    branches = multi_categorical_forward(x, masks, params, ACT_SIZES)
    branches = jax.block_until_ready(branches)
    branches_ref = reference_forward(x, masks, params, ACT_SIZES)

    ok = True
    for (lg, pr), (lg_r, pr_r) in zip(branches, branches_ref):
        ok &= bool(jnp.allclose(lg, lg_r, atol=1e-5, rtol=1e-5))
        ok &= bool(jnp.allclose(pr, pr_r, atol=1e-5, rtol=1e-5))

    if ok:
        print("KERNEL_OK")
    else:
        print("KERNEL_MISMATCH")
</pallas_src>

<mosaic_0001>
module attributes {stable_mosaic.version = 11 : i64} {
  func.func @_multicat_kernel(%arg0: i32, %arg1: memref<2x32xf32, #tpu.memory_space<vmem>>, %arg2: memref<32x128xf32, #tpu.memory_space<vmem>>, %arg3: memref<1x128xf32, #tpu.memory_space<vmem>>, %arg4: memref<2x128xi8, #tpu.memory_space<vmem>>, %arg5: memref<8x128xf32, #tpu.memory_space<vmem>>, %arg6: memref<128x8xf32, #tpu.memory_space<vmem>>, %arg7: memref<2x128xf32, #tpu.memory_space<vmem>>, %arg8: memref<2x128xf32, #tpu.memory_space<vmem>>) attributes {dimension_semantics = [#tpu.dimension_semantics<parallel>], iteration_bounds = array<i64: 1>, scalar_prefetch = 0 : i64, scratch_operands = 0 : i64, tpu.core_type = #tpu.core_type<tc>, window_params = [{transform_indices = @transform_0, window_bounds = array<i64: 2, 32>}, {pipeline_mode = #tpu.pipeline_mode<synchronous>, transform_indices = @transform_1, window_bounds = array<i64: 32, 128>}, {pipeline_mode = #tpu.pipeline_mode<synchronous>, transform_indices = @transform_2, window_bounds = array<i64: 1, 128>}, {transform_indices = @transform_3, window_bounds = array<i64: 2, 128>}, {pipeline_mode = #tpu.pipeline_mode<synchronous>, transform_indices = @transform_4, window_bounds = array<i64: 8, 128>}, {pipeline_mode = #tpu.pipeline_mode<synchronous>, transform_indices = @transform_5, window_bounds = array<i64: 128, 8>}, {transform_indices = @transform_6, window_bounds = array<i64: 2, 128>}, {transform_indices = @transform_7, window_bounds = array<i64: 2, 128>}]} {
    %c0 = arith.constant 0 : index
    %c0_0 = arith.constant 0 : index
    %0 = vector.load %arg1[%c0, %c0_0] : memref<2x32xf32, #tpu.memory_space<vmem>>, vector<2x32xf32>
    %c0_1 = arith.constant 0 : index
    %c0_2 = arith.constant 0 : index
    %1 = vector.load %arg2[%c0_1, %c0_2] : memref<32x128xf32, #tpu.memory_space<vmem>>, vector<32x128xf32>
    %c0_3 = arith.constant 0 : index
    %c0_4 = arith.constant 0 : index
    %2 = vector.load %arg3[%c0_3, %c0_4] : memref<1x128xf32, #tpu.memory_space<vmem>>, vector<1x128xf32>
    %c0_5 = arith.constant 0 : index
    %c0_6 = arith.constant 0 : index
    %3 = vector.load %arg4[%c0_5, %c0_6] : memref<2x128xi8, #tpu.memory_space<vmem>>, vector<2x128xi8>
    %c0_i8 = arith.constant 0 : i8
    %4 = vector.broadcast %c0_i8 : i8 to vector<2x128xi8>
    %5 = arith.cmpi ne, %3, %4 : vector<2x128xi8>
    %c0_7 = arith.constant 0 : index
    %c0_8 = arith.constant 0 : index
    %6 = vector.load %arg5[%c0_7, %c0_8] : memref<8x128xf32, #tpu.memory_space<vmem>>, vector<8x128xf32>
    %cst = arith.constant 5.000000e-01 : f32
    %7 = vector.broadcast %cst : f32 to vector<8x128xf32>
    %8 = arith.cmpf ogt, %6, %7 : vector<8x128xf32>
    %cst_9 = arith.constant dense<0.000000e+00> : vector<2x128xf32>
    %9 = tpu.matmul %0, %1, %cst_9 {dimension_numbers = #tpu.dot_dimension_numbers<[1], [0], [0], [1], [0, 0, 1, 1], [], []>} : vector<2x32xf32>, vector<32x128xf32>, vector<2x128xf32> -> vector<2x128xf32>
    %10 = vector.broadcast %2 : vector<1x128xf32> to vector<2x128xf32>
    %11 = arith.addf %9, %10 : vector<2x128xf32>
    %cst_10 = arith.constant -1.000000e+08 : f32
    %12 = vector.broadcast %cst_10 : f32 to vector<2x128xf32>
    %13 = arith.select %5, %11, %12 : vector<2x128xi1>, vector<2x128xf32>
    %c0_11 = arith.constant 0 : index
    %c0_12 = arith.constant 0 : index
    %14 = vector.load %arg7[%c0_11, %c0_12] : memref<2x128xf32, #tpu.memory_space<vmem>>, vector<2x128xf32>
    tpu.vector_store %arg7[%c0_11, %c0_12], %13 {strides = array<i32>} : memref<2x128xf32, #tpu.memory_space<vmem>>, vector<2x128xf32>,
    %cst_13 = arith.constant 0.000000e+00 : f32
    %15 = vector.broadcast %cst_13 : f32 to vector<2x128xf32>
    %16 = vector.extract_strided_slice %8 {offsets = [0, 0], sizes = [1, 128], strides = [1, 1]} : vector<8x128xi1> to vector<1x128xi1>
    %cst_14 = arith.constant 0xFF800000 : f32
    %17 = vector.shape_cast %16 : vector<1x128xi1> to vector<1x128xi1>
    %18 = vector.broadcast %17 : vector<1x128xi1> to vector<2x128xi1>
    %19 = vector.broadcast %cst_14 : f32 to vector<2x128xf32>
    %20 = arith.select %18, %13, %19 : vector<2x128xi1>, vector<2x128xf32>
    %cst_15 = arith.constant dense<0xFF800000> : vector<2xf32>
    %21 = vector.multi_reduction <maximumf>, %20, %cst_15 [1] : vector<2x128xf32> to vector<2xf32>
    %22 = vector.shape_cast %21 : vector<2xf32> to vector<2x1xf32>
    %cst_16 = arith.constant 0.000000e+00 : f32
    %23 = vector.shape_cast %16 : vector<1x128xi1> to vector<1x128xi1>
    %24 = vector.broadcast %23 : vector<1x128xi1> to vector<2x128xi1>
    %25 = vector.shape_cast %22 : vector<2x1xf32> to vector<2x1xf32>
    %26 = vector.broadcast %25 : vector<2x1xf32> to vector<2x128xf32>
    %27 = vector.broadcast %cst_16 : f32 to vector<2x128xf32>
    %28 = arith.select %24, %26, %27 : vector<2x128xi1>, vector<2x128xf32>
    %29 = arith.addf %15, %28 : vector<2x128xf32>
    %30 = vector.extract_strided_slice %8 {offsets = [1, 0], sizes = [1, 128], strides = [1, 1]} : vector<8x128xi1> to vector<1x128xi1>
    %cst_17 = arith.constant 0xFF800000 : f32
    %31 = vector.shape_cast %30 : vector<1x128xi1> to vector<1x128xi1>
    %32 = vector.broadcast %31 : vector<1x128xi1> to vector<2x128xi1>
    %33 = vector.broadcast %cst_17 : f32 to vector<2x128xf32>
    %34 = arith.select %32, %13, %33 : vector<2x128xi1>, vector<2x128xf32>
    %cst_18 = arith.constant dense<0xFF800000> : vector<2xf32>
    %35 = vector.multi_reduction <maximumf>, %34, %cst_18 [1] : vector<2x128xf32> to vector<2xf32>
    %36 = vector.shape_cast %35 : vector<2xf32> to vector<2x1xf32>
    %cst_19 = arith.constant 0.000000e+00 : f32
    %37 = vector.shape_cast %30 : vector<1x128xi1> to vector<1x128xi1>
    %38 = vector.broadcast %37 : vector<1x128xi1> to vector<2x128xi1>
    %39 = vector.shape_cast %36 : vector<2x1xf32> to vector<2x1xf32>
    %40 = vector.broadcast %39 : vector<2x1xf32> to vector<2x128xf32>
    %41 = vector.broadcast %cst_19 : f32 to vector<2x128xf32>
    %42 = arith.select %38, %40, %41 : vector<2x128xi1>, vector<2x128xf32>
    %43 = arith.addf %29, %42 : vector<2x128xf32>
    %44 = vector.extract_strided_slice %8 {offsets = [2, 0], sizes = [1, 128], strides = [1, 1]} : vector<8x128xi1> to vector<1x128xi1>
    %cst_20 = arith.constant 0xFF800000 : f32
    %45 = vector.shape_cast %44 : vector<1x128xi1> to vector<1x128xi1>
    %46 = vector.broadcast %45 : vector<1x128xi1> to vector<2x128xi1>
    %47 = vector.broadcast %cst_20 : f32 to vector<2x128xf32>
    %48 = arith.select %46, %13, %47 : vector<2x128xi1>, vector<2x128xf32>
    %cst_21 = arith.constant dense<0xFF800000> : vector<2xf32>
    %49 = vector.multi_reduction <maximumf>, %48, %cst_21 [1] : vector<2x128xf32> to vector<2xf32>
    %50 = vector.shape_cast %49 : vector<2xf32> to vector<2x1xf32>
    %cst_22 = arith.constant 0.000000e+00 : f32
    %51 = vector.shape_cast %44 : vector<1x128xi1> to vector<1x128xi1>
    %52 = vector.broadcast %51 : vector<1x128xi1> to vector<2x128xi1>
    %53 = vector.shape_cast %50 : vector<2x1xf32> to vector<2x1xf32>
    %54 = vector.broadcast %53 : vector<2x1xf32> to vector<2x128xf32>
    %55 = vector.broadcast %cst_22 : f32 to vector<2x128xf32>
    %56 = arith.select %52, %54, %55 : vector<2x128xi1>, vector<2x128xf32>
    %57 = arith.addf %43, %56 : vector<2x128xf32>
    %58 = arith.subf %13, %57 : vector<2x128xf32>
    %59 = math.exp %58 : vector<2x128xf32>
    %c0_23 = arith.constant 0 : index
    %c0_24 = arith.constant 0 : index
    %60 = vector.load %arg6[%c0_23, %c0_24] : memref<128x8xf32, #tpu.memory_space<vmem>>, vector<128x8xf32>
    %cst_25 = arith.constant dense<0.000000e+00> : vector<2x8xf32>
    %61 = tpu.matmul %59, %60, %cst_25 {dimension_numbers = #tpu.dot_dimension_numbers<[1], [0], [0], [1], [0, 0, 1, 1], [], []>} : vector<2x128xf32>, vector<128x8xf32>, vector<2x8xf32> -> vector<2x8xf32>
    %cst_26 = arith.constant 1.000000e-30 : f32
    %62 = vector.broadcast %cst_26 : f32 to vector<2x8xf32>
    %63 = arith.maximumf %61, %62 : vector<2x8xf32>
    %cst_27 = arith.constant 1.000000e+00 : f32
    %64 = vector.broadcast %cst_27 : f32 to vector<2x8xf32>
    %65 = arith.divf %64, %63 : vector<2x8xf32>
    %cst_28 = arith.constant dense<0.000000e+00> : vector<2x128xf32>
    %66 = tpu.matmul %65, %6, %cst_28 {dimension_numbers = #tpu.dot_dimension_numbers<[1], [0], [0], [1], [0, 0, 1, 1], [], []>} : vector<2x8xf32>, vector<8x128xf32>, vector<2x128xf32> -> vector<2x128xf32>
    %67 = arith.mulf %59, %66 : vector<2x128xf32>
    %c0_29 = arith.constant 0 : index
    %c0_30 = arith.constant 0 : index
    %68 = vector.load %arg8[%c0_29, %c0_30] : memref<2x128xf32, #tpu.memory_space<vmem>>, vector<2x128xf32>
    tpu.vector_store %arg8[%c0_29, %c0_30], %67 {strides = array<i32>} : memref<2x128xf32, #tpu.memory_space<vmem>>, vector<2x128xf32>,
    return
  }
  func.func @transform_0(%arg0: i32) -> (i32, i32) {
    %c0_i32 = arith.constant 0 : i32
    %c0_i32_0 = arith.constant 0 : i32
    return %arg0, %c0_i32 : i32, i32
  }
  func.func @transform_1(%arg0: i32) -> (i32, i32) {
    %c0_i32 = arith.constant 0 : i32
    %c0_i32_0 = arith.constant 0 : i32
    %c0_i32_1 = arith.constant 0 : i32
    return %c0_i32, %c0_i32_0 : i32, i32
  }
  func.func @transform_2(%arg0: i32) -> (i32, i32) {
    %c0_i32 = arith.constant 0 : i32
    %c0_i32_0 = arith.constant 0 : i32
    %c0_i32_1 = arith.constant 0 : i32
    return %c0_i32, %c0_i32_0 : i32, i32
  }
  func.func @transform_3(%arg0: i32) -> (i32, i32) {
    %c0_i32 = arith.constant 0 : i32
    %c0_i32_0 = arith.constant 0 : i32
    return %arg0, %c0_i32 : i32, i32
  }
  func.func @transform_4(%arg0: i32) -> (i32, i32) {
    %c0_i32 = arith.constant 0 : i32
    %c0_i32_0 = arith.constant 0 : i32
    %c0_i32_1 = arith.constant 0 : i32
    return %c0_i32, %c0_i32_0 : i32, i32
  }
  func.func @transform_5(%arg0: i32) -> (i32, i32) {
    %c0_i32 = arith.constant 0 : i32
    %c0_i32_0 = arith.constant 0 : i32
    %c0_i32_1 = arith.constant 0 : i32
    return %c0_i32, %c0_i32_0 : i32, i32
  }
  func.func @transform_6(%arg0: i32) -> (i32, i32) {
    %c0_i32 = arith.constant 0 : i32
    %c0_i32_0 = arith.constant 0 : i32
    return %arg0, %c0_i32 : i32, i32
  }
  func.func @transform_7(%arg0: i32) -> (i32, i32) {
    %c0_i32 = arith.constant 0 : i32
    %c0_i32_0 = arith.constant 0 : i32
    return %arg0, %c0_i32 : i32, i32
  }
}

</mosaic_0001>

<llo_original>
// kernel: tpu_custom_call.1
$region0: #{tpu_custom_call.1}
  #allocation0 [shape = 'u32[]', space=smem, size = 0x4, offset = 0x4, fixed_abs, tag = 'smem constant byte address 0x4 - core index']
  #allocation1 [shape = 'u32[144,128]{1,0:T(1,128)}', space=vmem, size = 0x12000, scoped, tag = 'internal scratch']
  %s0 = inlined_call_operand.vmem [shape: f32[2,32], index: 0, kind: input, shape index: {}]
  %s1 = inlined_call_operand.vmem [shape: f32[32,128], index: 1, kind: input, shape index: {}]
  %s2 = inlined_call_operand.vmem [shape: f32[1,128], index: 2, kind: input, shape index: {}]
  %s3 = inlined_call_operand.vmem [shape: s8[2,128], index: 3, kind: input, shape index: {}]
  %s4 = inlined_call_operand.vmem [shape: f32[8,128], index: 4, kind: input, shape index: {}]
  %s5 = inlined_call_operand.vmem [shape: f32[128,8], index: 5, kind: input, shape index: {}]
  %s6 = inlined_call_operand.hbm [shape: f32[2,128], index: 6, kind: output, shape index: {0}]
  %s7 = inlined_call_operand.hbm [shape: f32[2,128], index: 7, kind: output, shape index: {1}]
  %8 = xla_tuple %s6, %s7
  %s9 = sld [smem:[#allocation0]]
  $region42: #{tpu_custom_call.1} parent=0
    _
  %s11 = ssub.s32 1, %s9
  %s12 = scalar_select 0, %s11, %s9
  $region1: #{tpu_custom_call.1} parent=0
    #allocation2 [shape = 'u8[1024]{0}', space=vmem, size = 0x400, scoped, tag = 'output window, operand 0, single buffered']
    #allocation3 [shape = 's32[1]{0}', space=sflag, size = 0x4, scoped, tag = 'scoped memory for tpu_custom_call.1']
    #allocation4 [shape = 'u8[1024]{0}', space=vmem, size = 0x400, scoped, tag = 'output window, operand 1, single buffered']
    #allocation5 [shape = 's32[1]{0}', space=sflag, size = 0x4, scoped, tag = 'scoped memory for tpu_custom_call.1']
    %13 = vsyncpa [#allocation3], 0
    %14 = vsyncpa [#allocation5], 0
    // Predicated region
    $region2: #{tpu_custom_call.1} parent=1 // pred_check
      _
    $region3: #{tpu_custom_call.1} parent=1 // pred_check_branch
      %16 = sbr.rel (0) target = $region5
    $region4: #{tpu_custom_call.1} parent=1 // pred_region
      _
    $region5: #{tpu_custom_call.1} parent=1 // pred_fallthru
      _
    // Predicated region
    $region6: #{tpu_custom_call.1} parent=1 // pred_check
      _
    $region7: #{tpu_custom_call.1} parent=1 // pred_check_branch
      %18 = sbr.rel (0) target = $region9
    $region8: #{tpu_custom_call.1} parent=1 // pred_region
      _
    $region9: #{tpu_custom_call.1} parent=1 // pred_fallthru
      _
    // Predicated region
    $region10: #{tpu_custom_call.1} parent=1 // pred_check
      _
    $region11: #{tpu_custom_call.1} parent=1 // pred_check_branch
      %20 = sbr.rel (0) target = $region13
    $region12: #{tpu_custom_call.1} parent=1 // pred_region
      _
    $region13: #{tpu_custom_call.1} parent=1 // pred_fallthru
      _
    // Predicated region
    $region14: #{tpu_custom_call.1} parent=1 // pred_check
      _
    $region15: #{tpu_custom_call.1} parent=1 // pred_check_branch
      %22 = sbr.rel (0) target = $region17
    $region16: #{tpu_custom_call.1} parent=1 // pred_region
      _
    $region17: #{tpu_custom_call.1} parent=1 // pred_fallthru
      _
    // Predicated region
    $region18: #{tpu_custom_call.1} parent=1 // pred_check
      _
    $region19: #{tpu_custom_call.1} parent=1 // pred_check_branch
      %24 = sbr.rel (0) target = $region21
    $region20: #{tpu_custom_call.1} parent=1 // pred_region
      _
    $region21: #{tpu_custom_call.1} parent=1 // pred_fallthru
      _
    // Predicated region
    $region22: #{tpu_custom_call.1} parent=1 // pred_check
      _
    $region23: #{tpu_custom_call.1} parent=1 // pred_check_branch
      %26 = sbr.rel (0) target = $region25
    $region24: #{tpu_custom_call.1} parent=1 // pred_region
      _
    $region25: #{tpu_custom_call.1} parent=1 // pred_fallthru
      _
    %v29 = vld [vmem:[%s0] sm:$0x3]
    %v30 = vld [vmem:[%s1] sm:$0xff]
    %v31 = vld [vmem:[%s1 + $0x8] sm:$0xff]
    %v32 = vld [vmem:[%s1 + $0x10] sm:$0xff]
    %v33 = vld [vmem:[%s1 + $0x18] sm:$0xff]
    %v34 = vld [vmem:[%s2] sm:$0x1]
    %v35 = vld [vmem:[%s3] sm:$0x1]
    %vm36 = vnez %v35
    %v37 = vld [vmem:[%s4] sm:$0xff]
    %vm38 = vcmp.gt.f32.partialorder %v37, 0.5
    %v40 = vlaneseq
    %v41 = vshrl.u32 %v40, 7
    %v42 = vsub.s32 0, %v41
    %v43 = vrot.slane %v34, %v42
    %vm45 = vcmask 261120
    %v47 = vsel %vm45, %v29, 0
    %49 = vmatprep.subr.mxu0 0.0
    %50 = vmatpush1.msra.mxu0 %v30
    %51 = vmatprep.subr.mxu0 0.0
    %52 = vmatpush1.msra.mxu0 %v31
    %53 = vmatprep.subr.mxu0 0.0
    %54 = vmatpush1.msra.mxu0 %v32
    %55 = vmatprep.subr.mxu0 0.0
    %56 = vmatpush1.msra.mxu0 %v33
    %57 = vmatprep.subr.mxu0 0.0
    %58 = vmatpush1.msra.mxu0 0.0
    %59 = vmatprep.subr.mxu0 0.0
    %60 = vmatpush1.msra.mxu0 0.0
    %61 = vmatprep.subr.mxu0 0.0
    %62 = vmatpush1.msra.mxu0 0.0
    %63 = vmatprep.subr.mxu0 0.0
    %64 = vmatpush1.msra.mxu0 0.0
    %65 = vmatprep.subr.mxu0 0.0
    %66 = vmatpush1.msra.mxu0 0.0
    %67 = vmatprep.subr.mxu0 0.0
    %68 = vmatpush1.msra.mxu0 0.0
    %69 = vmatprep.subr.mxu0 0.0
    %70 = vmatpush1.msra.mxu0 0.0
    %71 = vmatprep.subr.mxu0 0.0
    %72 = vmatpush1.msra.mxu0 0.0
    %73 = vmatprep.subr.mxu0 0.0
    %74 = vmatpush1.msra.mxu0 0.0
    %75 = vmatprep.subr.mxu0 0.0
    %76 = vmatpush1.msra.mxu0 0.0
    %77 = vmatprep.subr.mxu0 0.0
    %78 = vmatpush1.msra.mxu0 0.0
    %79 = vmatprep.subr.mxu0 0.0
    %80 = vmatpush1.msra.mxu0 0.0
    %81 = vmatprep.subr.mxu0 0.0
    %82 = vmatpush1.msra.mxu0 0.0
    %83 = vmatprep.subr.mxu0 0.0
    %84 = vmatpush1.msra.mxu0 0.0
    %85 = vmatprep.subr.mxu0 0.0
    %86 = vmatpush1.msra.mxu0 0.0
    %87 = vmatprep.subr.mxu0 0.0
    %88 = vmatpush1.msra.mxu0 0.0
    %89 = vmatprep.subr.mxu0 0.0
    %90 = vmatpush1.msra.mxu0 0.0
    %91 = vmatprep.subr.mxu0 0.0
    %92 = vmatpush1.msra.mxu0 0.0
    %93 = vmatprep.subr.mxu0 0.0
    %94 = vmatpush1.msra.mxu0 0.0
    %95 = vmatprep.subr.mxu0 0.0
    %96 = vmatpush1.msra.mxu0 0.0
    %97 = vmatprep.subr.mxu0 0.0
    %98 = vmatpush1.msra.mxu0 0.0
    %99 = vmatprep.subr.mxu0 0.0
    %100 = vmatpush1.msra.mxu0 0.0
    %101 = vmatprep.subr.mxu0 0.0
    %102 = vmatpush1.msra.mxu0 0.0
    %103 = vmatprep.subr.mxu0 0.0
    %104 = vmatpush1.msra.mxu0 0.0
    %105 = vmatprep.subr.mxu0 0.0
    %106 = vmatpush1.msra.mxu0 0.0
    %107 = vmatprep.subr.mxu0 0.0
    %108 = vmatpush1.msra.mxu0 0.0
    %109 = vmatprep.subr.mxu0 0.0
    %110 = vmatpush1.msra.mxu0 0.0
    %111 = vmatprep.subr.mxu0 0.0
    %112 = vmatpush1.msra.mxu0 0.0
    %113 = vmatprep.mubr.f32.mxu0 0.0
    %114 = vmatmul.mubr.f32.gmra.mrb[0].mxu0 %v47
    %v115 = vpop.f32.mrb[0].mxu0
    %v116 = vadd.f32 %v43, %v115
    %v117 = vpop.f32.mrb[0].mxu0
    %118 = vdwg.mxu0
    %v119 = vsel %vm36, 16843009, 0
    %v120 = vunpack.c.0.s8 %v119
    %vm121 = vcmp.ne.s32.totalorder %v120, 0
    %v122 = vsel %vm121, %v116, -1e+08
    %123 = vst [vmem:[#allocation2] sm:$0x3] %v122
    %v124 = vsel %vm38, 1, 0
    %vm125 = vcmp.eq.s32.totalorder %v124, 1
    %v127 = vrot.slane %v122, 1
    %v130 = vsel %vm125, %v122, -inf
    %v131 = vsel %vm125, %v127, -inf
    %v134 = vrot.slane %v131, 7
    %vm135 = vcmask 1041409
    %v136 = vsel %vm135, %v134, %v130
    %vm138 = vcmask 1041408
    %v139 = vsel %vm138, %v136, -inf
    %140 = vmax.xlane.f32.xlu0 %v139
    %v141 = vpop.xlane.xlu0 %140
    %v143 = vrot.slane %v141, 1
    %v146 = vsel %vm125, %v141, 0.0
    %v147 = vsel %vm125, %v143, 0.0
    %v148 = vadd.f32 %v146, 0.0
    %v149 = vadd.f32 %v147, 0.0
    %v150 = vrot.slane %v122, 7
    %v152 = vsel %vm125, %v150, -inf
    %v154 = vrot.slane %v130, 7
    %vm155 = vcmask 1042434
    %v156 = vsel %vm155, %v154, %v152
    %vm158 = vcmask 1042433
    %v159 = vsel %vm158, %v156, -inf
    %160 = vmax.xlane.f32.xlu0 %v159
    %v161 = vpop.xlane.xlu0 %160
    %v163 = vrot.slane %v161, 1
    %v166 = vsel %vm125, %v161, 0.0
    %v167 = vsel %vm125, %v163, 0.0
    %v170 = vrot.slane %v166, 1
    %v171 = vrot.slane %v167, 1
    %v174 = vadd.f32 %v148, %v170
    %v175 = vadd.f32 %v149, %v171
    %v176 = vrot.slane %v122, 6
    %v178 = vsel %vm125, %v176, -inf
    %v180 = vrot.slane %v152, 7
    %vm181 = vcmask 1043459
    %v182 = vsel %vm181, %v180, %v178
    %vm184 = vcmask 1043458
    %v185 = vsel %vm184, %v182, -inf
    %186 = vmax.xlane.f32.xlu0 %v185
    %v187 = vpop.xlane.xlu0 %186
    %v189 = vrot.slane %v187, 1
    %v192 = vsel %vm125, %v187, 0.0
    %v193 = vsel %vm125, %v189, 0.0
    %v196 = vrot.slane %v192, 2
    %v197 = vrot.slane %v193, 2
    %v200 = vadd.f32 %v174, %v196
    %v201 = vadd.f32 %v175, %v197
    %v204 = vrot.slane %v201, 7
    %v205 = vsel %vm135, %v204, %v200
    %v207 = vsub.f32 %v122, %v205
    %v208 = vmul.f32 %v207, 1.442695
    %v209 = vpow.pop %v208
    %v210 = vld [vmem:[%s5] sm:$0xff]
    %v211 = vld [vmem:[%s5 + $0x8] sm:$0xff]
    %v212 = vld [vmem:[%s5 + $0x10] sm:$0xff]
    %v213 = vld [vmem:[%s5 + $0x18] sm:$0xff]
    %v214 = vld [vmem:[%s5 + $0x20] sm:$0xff]
    %v215 = vld [vmem:[%s5 + $0x28] sm:$0xff]
    %v216 = vld [vmem:[%s5 + $0x30] sm:$0xff]
    %v217 = vld [vmem:[%s5 + $0x38] sm:$0xff]
    %v218 = vld [vmem:[%s5 + $0x40] sm:$0xff]
    %v219 = vld [vmem:[%s5 + $0x48] sm:$0xff]
    %v220 = vld [vmem:[%s5 + $0x50] sm:$0xff]
    %v221 = vld [vmem:[%s5 + $0x58] sm:$0xff]
    %v222 = vld [vmem:[%s5 + $0x60] sm:$0xff]
    %v223 = vld [vmem:[%s5 + $0x68] sm:$0xff]
    %v224 = vld [vmem:[%s5 + $0x70] sm:$0xff]
    %v225 = vld [vmem:[%s5 + $0x78] sm:$0xff]
    %226 = vmatprep.subr.mxu0 0.0
    %227 = vmatpush1.msra.mxu0 %v210
    %228 = vmatprep.subr.mxu0 0.0
    %229 = vmatpush1.msra.mxu0 %v211
    %230 = vmatprep.subr.mxu0 0.0
    %231 = vmatpush1.msra.mxu0 %v212
    %232 = vmatprep.subr.mxu0 0.0
    %233 = vmatpush1.msra.mxu0 %v213
    %234 = vmatprep.subr.mxu0 0.0
    %235 = vmatpush1.msra.mxu0 %v214
    %236 = vmatprep.subr.mxu0 0.0
    %237 = vmatpush1.msra.mxu0 %v215
    %238 = vmatprep.subr.mxu0 0.0
    %239 = vmatpush1.msra.mxu0 %v216
    %240 = vmatprep.subr.mxu0 0.0
    %241 = vmatpush1.msra.mxu0 %v217
    %242 = vmatprep.subr.mxu0 0.0
    %243 = vmatpush1.msra.mxu0 %v218
    %244 = vmatprep.subr.mxu0 0.0
    %245 = vmatpush1.msra.mxu0 %v219
    %246 = vmatprep.subr.mxu0 0.0
    %247 = vmatpush1.msra.mxu0 %v220
    %248 = vmatprep.subr.mxu0 0.0
    %249 = vmatpush1.msra.mxu0 %v221
    %250 = vmatprep.subr.mxu0 0.0
    %251 = vmatpush1.msra.mxu0 %v222
    %252 = vmatprep.subr.mxu0 0.0
    %253 = vmatpush1.msra.mxu0 %v223
    %254 = vmatprep.subr.mxu0 0.0
    %255 = vmatpush1.msra.mxu0 %v224
    %256 = vmatprep.subr.mxu0 0.0
    %257 = vmatpush1.msra.mxu0 %v225
    %258 = vmatprep.subr.mxu0 0.0
    %259 = vmatpush1.msra.mxu0 0.0
    %260 = vmatprep.subr.mxu0 0.0
    %261 = vmatpush1.msra.mxu0 0.0
    %262 = vmatprep.subr.mxu0 0.0
    %263 = vmatpush1.msra.mxu0 0.0
    %264 = vmatprep.subr.mxu0 0.0
    %265 = vmatpush1.msra.mxu0 0.0
    %266 = vmatprep.subr.mxu0 0.0
    %267 = vmatpush1.msra.mxu0 0.0
    %268 = vmatprep.subr.mxu0 0.0
    %269 = vmatpush1.msra.mxu0 0.0
    %270 = vmatprep.subr.mxu0 0.0
    %271 = vmatpush1.msra.mxu0 0.0
    %272 = vmatprep.subr.mxu0 0.0
    %273 = vmatpush1.msra.mxu0 0.0
    %274 = vmatprep.subr.mxu0 0.0
    %275 = vmatpush1.msra.mxu0 0.0
    %276 = vmatprep.subr.mxu0 0.0
    %277 = vmatpush1.msra.mxu0 0.0
    %278 = vmatprep.subr.mxu0 0.0
    %279 = vmatpush1.msra.mxu0 0.0
    %280 = vmatprep.subr.mxu0 0.0
    %281 = vmatpush1.msra.mxu0 0.0
    %282 = vmatprep.subr.mxu0 0.0
    %283 = vmatpush1.msra.mxu0 0.0
    %284 = vmatprep.subr.mxu0 0.0
    %285 = vmatpush1.msra.mxu0 0.0
    %286 = vmatprep.subr.mxu0 0.0
    %287 = vmatpush1.msra.mxu0 0.0
    %288 = vmatprep.subr.mxu0 0.0
    %289 = vmatpush1.msra.mxu0 0.0
    %290 = vmatprep.mubr.f32.mxu0 0.0
    %291 = vmatmul.mubr.f32.gmra.mrb[0].mxu0 %v209
    %v292 = vpop.f32.mrb[0].mxu0
    %v293 = vadd.f32 0.0, %v292
    %v294 = vpop.f32.mrb[0].mxu0
    %295 = vdwg.mxu0
    %v296 = vmax.f32 %v293, 1e-30
    %v297 = vrcp.pop %v296
    %v298 = vmul.f32 1.0, %v297
    %vm299 = vcmask 64512
    %v301 = vsel %vm299, %v298, 0
    %303 = vmatprep.subr.mxu0 0.0
    %304 = vmatpush1.msra.mxu0 %v37
    %305 = vmatprep.subr.mxu0 0.0
    %306 = vmatpush1.msra.mxu0 0.0
    %307 = vmatprep.subr.mxu0 0.0
    %308 = vmatpush1.msra.mxu0 0.0
    %309 = vmatprep.subr.mxu0 0.0
    %310 = vmatpush1.msra.mxu0 0.0
    %311 = vmatprep.subr.mxu0 0.0
    %312 = vmatpush1.msra.mxu0 0.0
    %313 = vmatprep.subr.mxu0 0.0
    %314 = vmatpush1.msra.mxu0 0.0
    %315 = vmatprep.subr.mxu0 0.0
    %316 = vmatpush1.msra.mxu0 0.0
    %317 = vmatprep.subr.mxu0 0.0
    %318 = vmatpush1.msra.mxu0 0.0
    %319 = vmatprep.subr.mxu0 0.0
    %320 = vmatpush1.msra.mxu0 0.0
    %321 = vmatprep.subr.mxu0 0.0
    %322 = vmatpush1.msra.mxu0 0.0
    %323 = vmatprep.subr.mxu0 0.0
    %324 = vmatpush1.msra.mxu0 0.0
    %325 = vmatprep.subr.mxu0 0.0
    %326 = vmatpush1.msra.mxu0 0.0
    %327 = vmatprep.subr.mxu0 0.0
    %328 = vmatpush1.msra.mxu0 0.0
    %329 = vmatprep.subr.mxu0 0.0
    %330 = vmatpush1.msra.mxu0 0.0
    %331 = vmatprep.subr.mxu0 0.0
    %332 = vmatpush1.msra.mxu0 0.0
    %333 = vmatprep.subr.mxu0 0.0
    %334 = vmatpush1.msra.mxu0 0.0
    %335 = vmatprep.subr.mxu0 0.0
    %336 = vmatpush1.msra.mxu0 0.0
    %337 = vmatprep.subr.mxu0 0.0
    %338 = vmatpush1.msra.mxu0 0.0
    %339 = vmatprep.subr.mxu0 0.0
    %340 = vmatpush1.msra.mxu0 0.0
    %341 = vmatprep.subr.mxu0 0.0
    %342 = vmatpush1.msra.mxu0 0.0
    %343 = vmatprep.subr.mxu0 0.0
    %344 = vmatpush1.msra.mxu0 0.0
    %345 = vmatprep.subr.mxu0 0.0
    %346 = vmatpush1.msra.mxu0 0.0
    %347 = vmatprep.subr.mxu0 0.0
    %348 = vmatpush1.msra.mxu0 0.0
    %349 = vmatprep.subr.mxu0 0.0
    %350 = vmatpush1.msra.mxu0 0.0
    %351 = vmatprep.subr.mxu0 0.0
    %352 = vmatpush1.msra.mxu0 0.0
    %353 = vmatprep.subr.mxu0 0.0
    %354 = vmatpush1.msra.mxu0 0.0
    %355 = vmatprep.subr.mxu0 0.0
    %356 = vmatpush1.msra.mxu0 0.0
    %357 = vmatprep.subr.mxu0 0.0
    %358 = vmatpush1.msra.mxu0 0.0
    %359 = vmatprep.subr.mxu0 0.0
    %360 = vmatpush1.msra.mxu0 0.0
    %361 = vmatprep.subr.mxu0 0.0
    %362 = vmatpush1.msra.mxu0 0.0
    %363 = vmatprep.subr.mxu0 0.0
    %364 = vmatpush1.msra.mxu0 0.0
    %365 = vmatprep.subr.mxu0 0.0
    %366 = vmatpush1.msra.mxu0 0.0
    %367 = vmatprep.mubr.f32.mxu0 0.0
    %368 = vmatmul.mubr.f32.gmra.mrb[0].mxu0 %v301
    %v369 = vpop.f32.mrb[0].mxu0
    %v370 = vadd.f32 0.0, %v369
    %v371 = vpop.f32.mrb[0].mxu0
    %372 = vdwg.mxu0
    %v373 = vmul.f32 %v209, %v370
    %374 = vst [vmem:[#allocation4] sm:$0x3] %v373
    // Predicated region
    $region26: #{tpu_custom_call.1} parent=1 // pred_check
      _
    $region27: #{tpu_custom_call.1} parent=1 // pred_check_branch
      %376 = sbr.rel (0) target = $region29
    $region28: #{tpu_custom_call.1} parent=1 // pred_region
      %s378 = ssub.s32 32, 32
      %379 = vsyncadd [#allocation3], %s378
      %s381 = sshll.u32 [#allocation2], 4
      %s382 = int_to_ptr.vmem [resolvable:$true] %s381
      %384 = dma.vmem_to_hbm [thread:$0]  %s382, 32, %s6, [#allocation3]
    $region29: #{tpu_custom_call.1} parent=1 // pred_fallthru
      _
    // Predicated region
    $region30: #{tpu_custom_call.1} parent=1 // pred_check
      _
    $region31: #{tpu_custom_call.1} parent=1 // pred_check_branch
      %386 = sbr.rel (0) target = $region33
    $region32: #{tpu_custom_call.1} parent=1 // pred_region
      %s388 = ssub.s32 32, 32
      %389 = vsyncadd [#allocation5], %s388
      %s391 = sshll.u32 [#allocation4], 4
      %s392 = int_to_ptr.vmem [resolvable:$true] %s391
      %394 = dma.vmem_to_hbm [thread:$0]  %s392, 32, %s7, [#allocation5]
    $region33: #{tpu_custom_call.1} parent=1 // pred_fallthru
      _
    // Predicated region
    $region34: #{tpu_custom_call.1} parent=1 // pred_check
      _
    $region35: #{tpu_custom_call.1} parent=1 // pred_check_branch
      %396 = sbr.rel (0) target = $region37
    $region36: #{tpu_custom_call.1} parent=1 // pred_region
      %397 = dma.done [#allocation3], 32
    $region37: #{tpu_custom_call.1} parent=1 // pred_fallthru
      _
    // Predicated region
    $region38: #{tpu_custom_call.1} parent=1 // pred_check
      _
    $region39: #{tpu_custom_call.1} parent=1 // pred_check_branch
      %399 = sbr.rel (0) target = $region41
    $region40: #{tpu_custom_call.1} parent=1 // pred_region
      %400 = dma.done [#allocation5], 32
    $region41: #{tpu_custom_call.1} parent=1 // pred_fallthru
      _
    %401 = vsyncpa [#allocation3], 1
    %402 = vsyncpa [#allocation5], 1

</llo_original>
